<compile_context>
chip_gen: v6e
topology: v6e:2x2x1
jax: 0.10.0
libtpu: 0.0.40
codegen_flags: <defaults>
</compile_context>

<pallas_src>
import math
import functools

import jax
import jax.numpy as jnp
from jax.experimental import pallas as pl
from jax.experimental.pallas import tpu as pltpu

ACTIVATION_COEFFS = {"relu": 2.0}

_LANE = 128
_HALO_BLK = 128                       # lane-aligned halo width (must be >= k_max-1)
_DEF_TL = 1024                        # default L tile (lanes)
_VMEM_BUDGET = 24 * 1024 * 1024       # conservative per-step budget (v7x-safe)
_VMEM_LIMIT = 48 * 1024 * 1024        # scoped VMEM limit (< 64 MiB v7x physical)


def _round_up(x, m):
    return (x + m - 1) // m * m


def _conv_bank_kernel(x_ref, halo_ref, w_ref, b_ref, o_ref, *, k_max, tl, c_in):
    """One (batch, L-tile) step of the fused conv bank.

    x_ref    : [1, C, TL]            current L tile of the shared-padded input
    halo_ref : [1, C, 128]           next 128 columns (right halo >= k_max-1)
    w_ref    : [Co_total, k_max*C]   fused per-tap weights (zero-padded branches)
    b_ref    : [Co_total, 1]         fused bias (f32)
    o_ref    : [1, Co_total, TL]     output tile, channels-first (PyTorch layout)
    """
    # Lane-aligned concat (both pieces are multiples of 128 lanes).
    xw = jnp.concatenate([x_ref[0], halo_ref[0]], axis=-1)   # [C, TL + 128]
    co = o_ref.shape[1]
    acc = jnp.zeros((co, tl), jnp.float32)
    # k_max static taps -> k_max MXU matmuls accumulating in f32 (vreg-resident
    # for moderate Co*TL). L stays on the lane axis of every operand/result.
    for s in range(k_max):
        w_s = w_ref[:, s * c_in:(s + 1) * c_in]              # [Co, C]
        acc = acc + jnp.dot(w_s, xw[:, s:s + tl],
                            preferred_element_type=jnp.float32)
    acc = acc + b_ref[...]                                   # broadcast over lanes
    o_ref[0] = jnp.maximum(acc, 0.0).astype(o_ref.dtype)     # ReLU


def _choose_tl(L, C, Co, k_max, in_bytes, out_bytes):
    """Largest power-of-two multiple of 128 that covers L and fits VMEM budget."""
    def vmem_est(t):
        x_blk = C * t * in_bytes
        h_blk = C * _HALO_BLK * in_bytes
        o_blk = Co * t * out_bytes
        w_blk = Co * k_max * C * in_bytes + Co * 4
        temps = Co * t * 4 + C * (t + _HALO_BLK) * in_bytes
        return 2 * (x_blk + h_blk + o_blk + w_blk) + temps    # double-buffered

    target = _round_up(max(L, 1), _LANE)
    tl = _DEF_TL
    while tl > _LANE and (tl // 2 >= target or vmem_est(tl) > _VMEM_BUDGET):
        tl //= 2
    return tl


def conv1d_bank(x_bcl, w_fused, b_fused, *, k_max, left, compute_dtype):
    """Fused conv bank. x_bcl: [B, C, L]; w_fused: [Co, k_max*C]; returns [B, Co, L]."""
    B, C, L = x_bcl.shape
    Co = w_fused.shape[0]
    assert k_max - 1 <= _HALO_BLK, "halo block too small for this kernel size"

    in_bytes = jnp.dtype(compute_dtype).itemsize
    out_bytes = x_bcl.dtype.itemsize
    tl = _choose_tl(L, C, Co, k_max, in_bytes, out_bytes)
    nl = pl.cdiv(L, tl)
    lxp = nl * tl + _HALO_BLK                     # halo block of last tile in-bounds

    # One shared asymmetric pad: folds per-branch conv padding + even-k trim
    # (left = (k_max-1)//2) and the tile-alignment / halo zeros.
    xp = jnp.pad(x_bcl, ((0, 0), (0, 0), (left, lxp - L - left)))
    xp = xp.astype(compute_dtype)                 # bf16 halves x DMA when enabled
    wf = w_fused.astype(compute_dtype)

    k_flat = k_max * C
    blk_idx = tl // _HALO_BLK
    kernel = functools.partial(_conv_bank_kernel, k_max=k_max, tl=tl, c_in=C)

    cost = pl.CostEstimate(
        flops=2 * B * nl * tl * k_flat * Co,
        transcendentals=0,
        bytes_accessed=(xp.size * xp.dtype.itemsize
                        + wf.size * wf.dtype.itemsize
                        + b_fused.size * b_fused.dtype.itemsize
                        + B * Co * L * out_bytes),
    )

    return pl.pallas_call(
        kernel,
        out_shape=jax.ShapeDtypeStruct((B, Co, L), x_bcl.dtype),
        grid_spec=pltpu.PrefetchScalarGridSpec(
            num_scalar_prefetch=0,
            grid=(B, nl),
            in_specs=[
                # current L tile
                pl.BlockSpec((1, C, tl), lambda b, l: (b, 0, l)),
                # right halo: next 128 lanes of the SAME padded array
                pl.BlockSpec((1, C, _HALO_BLK),
                             lambda b, l: (b, 0, (l + 1) * blk_idx)),
                # fused weight bank + bias (constant across the grid)
                pl.BlockSpec((Co, k_flat), lambda b, l: (0, 0)),
                pl.BlockSpec((Co, 1), lambda b, l: (0, 0)),
            ],
            out_specs=pl.BlockSpec((1, Co, tl), lambda b, l: (b, 0, l)),
        ),
        compiler_params=pltpu.CompilerParams(
            dimension_semantics=("parallel", "parallel"),
            vmem_limit_bytes=_VMEM_LIMIT),
        cost_estimate=cost,
    )(xp, xp, wf, b_fused)


class Conv1dPallas:
    """JAX/Pallas port of XDPX Conv1d (forward pass)."""

    def __init__(self, in_channels, out_channels, activation, kernel_sizes, key,
                 compute_dtype=jnp.float32):
        assert activation == "relu", "only 'relu' activation is wired up here"
        coeff = ACTIVATION_COEFFS[activation]
        n = len(kernel_sizes)
        out_splits = [out_channels // n + (i < out_channels % n) for i in range(n)]
        self.kernel_sizes = list(kernel_sizes)
        self.in_channels = in_channels
        self.out_channels = out_channels
        self.compute_dtype = compute_dtype

        self.params = []
        for ks, co in zip(kernel_sizes, out_splits):
            key, sub = jax.random.split(key)
            std = math.sqrt(1.0 / (in_channels * ks) * coeff)
            v = jax.random.normal(sub, (co, in_channels, ks), jnp.float32) * std
            # weight_norm (dim=0): w = g * v / ||v||, g initialized to ||v||
            # (so w == v at init; kept explicit for checkpoint compatibility).
            norm = jnp.sqrt(jnp.sum(v * v, axis=(1, 2), keepdims=True))
            g = norm
            w = g * v / norm                        # [Co_i, C_in, k]
            bias = jnp.zeros((co,), jnp.float32)    # nn.init.zeros_
            self.params.append((w, bias))

        # Build the fused weight bank once: all branches share one matmul chain.
        k_max = max(kernel_sizes)
        left_s = (k_max - 1) // 2
        blocks = []
        for (w, _), ks in zip(self.params, kernel_sizes):
            left_i = (ks - 1) // 2
            shift = left_s - left_i                 # tap offset inside shared halo
            w_t = jnp.transpose(w, (0, 2, 1))       # [Co_i, k_i, C]
            w_t = jnp.pad(w_t, ((0, 0), (shift, k_max - ks - shift), (0, 0)))
            blocks.append(w_t.reshape(w.shape[0], k_max * in_channels))
        self.k_max = k_max
        self.left = left_s
        self.w_fused = jnp.concatenate(blocks, axis=0)                  # [Co, k*C]
        self.b_fused = jnp.concatenate([b for _, b in self.params])[:, None]  # [Co,1]

    def __call__(self, x_bcl):
        """x_bcl is [B, C_in, L] (PyTorch layout); returns [B, out_channels, L]."""
        return conv1d_bank(x_bcl, self.w_fused, self.b_fused,
                           k_max=self.k_max, left=self.left,
                           compute_dtype=self.compute_dtype)


def reference(x_bcl, params, kernel_sizes):
    """Pure-JAX reference reproducing the PyTorch forward exactly."""
    outs = []
    for (w, bias), k in zip(params, kernel_sizes):
        p = int(math.ceil((k - 1) / 2))
        out = jax.lax.conv_general_dilated(
            x_bcl, w, window_strides=(1,), padding=[(p, p)],
            dimension_numbers=("NCW", "OIW", "NCW"))
        out = out + bias[None, :, None]
        if k % 2 == 0:
            out = out[:, :, 1:]
        outs.append(jnp.maximum(out, 0.0))
    return jnp.concatenate(outs, axis=1)


if __name__ == "__main__":
    B, C_in, L = 2, 4, 16
    out_channels = 6
    kernel_sizes = [3, 4]

    key = jax.random.PRNGKey(0)
    key, xk, pk = jax.random.split(key, 3)
    x = jax.random.normal(xk, (B, C_in, L), jnp.float32)     # [B x C x L]

    # f32 path: exact match against the pure-JAX reference.
    module = Conv1dPallas(C_in, out_channels, "relu", kernel_sizes, pk)
    y = jax.block_until_ready(module(x))
    y_ref = reference(x, module.params, kernel_sizes)
    assert y.shape == (B, out_channels, L), y.shape
    assert jnp.allclose(y, y_ref, atol=1e-5, rtol=1e-5), "f32 mismatch vs reference"

    # bf16 MXU-operand path (f32 accumulation) — the performance configuration.
    module_bf16 = Conv1dPallas(C_in, out_channels, "relu", kernel_sizes, pk,
                               compute_dtype=jnp.bfloat16)
    y16 = jax.block_until_ready(module_bf16(x))
    assert y16.shape == (B, out_channels, L), y16.shape
    assert jnp.allclose(y16, y_ref, atol=5e-2, rtol=5e-2), "bf16 mismatch vs reference"

    print("KERNEL_OK")
</pallas_src>

<mosaic_0001>
module attributes {stable_mosaic.version = 11 : i64} {
  func.func @_conv_bank_kernel(%arg0: i32, %arg1: i32, %arg2: memref<1x4x128xf32, #tpu.memory_space<vmem>>, %arg3: memref<1x4x128xf32, #tpu.memory_space<vmem>>, %arg4: memref<6x16xf32, #tpu.memory_space<vmem>>, %arg5: memref<6x1xf32, #tpu.memory_space<vmem>>, %arg6: memref<1x6x128xf32, #tpu.memory_space<vmem>>) attributes {dimension_semantics = [#tpu.dimension_semantics<parallel>, #tpu.dimension_semantics<parallel>], iteration_bounds = array<i64: 2, 1>, scalar_prefetch = 0 : i64, scratch_operands = 0 : i64, tpu.core_type = #tpu.core_type<tc>, window_params = [{transform_indices = @transform_0, window_bounds = array<i64: 1, 4, 128>}, {transform_indices = @transform_1, window_bounds = array<i64: 1, 4, 128>}, {pipeline_mode = #tpu.pipeline_mode<synchronous>, transform_indices = @transform_2, window_bounds = array<i64: 6, 16>}, {pipeline_mode = #tpu.pipeline_mode<synchronous>, transform_indices = @transform_3, window_bounds = array<i64: 6, 1>}, {transform_indices = @transform_4, window_bounds = array<i64: 1, 6, 128>}]} {
    %c0 = arith.constant 0 : index
    %c0_0 = arith.constant 0 : index
    %c0_1 = arith.constant 0 : index
    %0 = vector.load %arg2[%c0, %c0_0, %c0_1] : memref<1x4x128xf32, #tpu.memory_space<vmem>>, vector<1x4x128xf32>
    %1 = vector.shape_cast %0 : vector<1x4x128xf32> to vector<4x128xf32>
    %c0_2 = arith.constant 0 : index
    %c0_3 = arith.constant 0 : index
    %c0_4 = arith.constant 0 : index
    %2 = vector.load %arg3[%c0_2, %c0_3, %c0_4] : memref<1x4x128xf32, #tpu.memory_space<vmem>>, vector<1x4x128xf32>
    %3 = vector.shape_cast %2 : vector<1x4x128xf32> to vector<4x128xf32>
    %4 = tpu.concatenate %1, %3 in 1 : vector<4x128xf32>, vector<4x128xf32> -> vector<4x256xf32>
    %cst = arith.constant 0.000000e+00 : f32
    %5 = vector.broadcast %cst : f32 to vector<6x128xf32>
    %c0_5 = arith.constant 0 : index
    %c0_6 = arith.constant 0 : index
    %6 = vector.load %arg4[%c0_5, %c0_6] : memref<6x16xf32, #tpu.memory_space<vmem>>, vector<6x4xf32>
    %7 = vector.extract_strided_slice %4 {offsets = [0, 0], sizes = [4, 128], strides = [1, 1]} : vector<4x256xf32> to vector<4x128xf32>
    %cst_7 = arith.constant dense<0.000000e+00> : vector<6x128xf32>
    %8 = tpu.matmul %6, %7, %cst_7 {dimension_numbers = #tpu.dot_dimension_numbers<[1], [0], [0], [1], [0, 0, 1, 1], [], []>} : vector<6x4xf32>, vector<4x128xf32>, vector<6x128xf32> -> vector<6x128xf32>
    %9 = arith.addf %5, %8 : vector<6x128xf32>
    %c0_8 = arith.constant 0 : index
    %c4 = arith.constant 4 : index
    %10 = vector.load %arg4[%c0_8, %c4] : memref<6x16xf32, #tpu.memory_space<vmem>>, vector<6x4xf32>
    %11 = vector.extract_strided_slice %4 {offsets = [0, 1], sizes = [4, 128], strides = [1, 1]} : vector<4x256xf32> to vector<4x128xf32>
    %cst_9 = arith.constant dense<0.000000e+00> : vector<6x128xf32>
    %12 = tpu.matmul %10, %11, %cst_9 {dimension_numbers = #tpu.dot_dimension_numbers<[1], [0], [0], [1], [0, 0, 1, 1], [], []>} : vector<6x4xf32>, vector<4x128xf32>, vector<6x128xf32> -> vector<6x128xf32>
    %13 = arith.addf %9, %12 : vector<6x128xf32>
    %c0_10 = arith.constant 0 : index
    %c8 = arith.constant 8 : index
    %14 = vector.load %arg4[%c0_10, %c8] : memref<6x16xf32, #tpu.memory_space<vmem>>, vector<6x4xf32>
    %15 = vector.extract_strided_slice %4 {offsets = [0, 2], sizes = [4, 128], strides = [1, 1]} : vector<4x256xf32> to vector<4x128xf32>
    %cst_11 = arith.constant dense<0.000000e+00> : vector<6x128xf32>
    %16 = tpu.matmul %14, %15, %cst_11 {dimension_numbers = #tpu.dot_dimension_numbers<[1], [0], [0], [1], [0, 0, 1, 1], [], []>} : vector<6x4xf32>, vector<4x128xf32>, vector<6x128xf32> -> vector<6x128xf32>
    %17 = arith.addf %13, %16 : vector<6x128xf32>
    %c0_12 = arith.constant 0 : index
    %c12 = arith.constant 12 : index
    %18 = vector.load %arg4[%c0_12, %c12] : memref<6x16xf32, #tpu.memory_space<vmem>>, vector<6x4xf32>
    %19 = vector.extract_strided_slice %4 {offsets = [0, 3], sizes = [4, 128], strides = [1, 1]} : vector<4x256xf32> to vector<4x128xf32>
    %cst_13 = arith.constant dense<0.000000e+00> : vector<6x128xf32>
    %20 = tpu.matmul %18, %19, %cst_13 {dimension_numbers = #tpu.dot_dimension_numbers<[1], [0], [0], [1], [0, 0, 1, 1], [], []>} : vector<6x4xf32>, vector<4x128xf32>, vector<6x128xf32> -> vector<6x128xf32>
    %21 = arith.addf %17, %20 : vector<6x128xf32>
    %c0_14 = arith.constant 0 : index
    %c0_15 = arith.constant 0 : index
    %22 = vector.load %arg5[%c0_14, %c0_15] : memref<6x1xf32, #tpu.memory_space<vmem>>, vector<6x1xf32>
    %23 = vector.broadcast %22 : vector<6x1xf32> to vector<6x128xf32>
    %24 = arith.addf %21, %23 : vector<6x128xf32>
    %cst_16 = arith.constant 0.000000e+00 : f32
    %25 = vector.broadcast %cst_16 : f32 to vector<6x128xf32>
    %26 = arith.maximumf %24, %25 : vector<6x128xf32>
    %c0_17 = arith.constant 0 : index
    %c0_18 = arith.constant 0 : index
    %c0_19 = arith.constant 0 : index
    %27 = vector.load %arg6[%c0_17, %c0_18, %c0_19] : memref<1x6x128xf32, #tpu.memory_space<vmem>>, vector<1x6x128xf32>
    %28 = vector.shape_cast %27 : vector<1x6x128xf32> to vector<6x128xf32>
    %29 = vector.shape_cast %26 : vector<6x128xf32> to vector<1x6x128xf32>
    tpu.vector_store %arg6[%c0_17, %c0_18, %c0_19], %29 {strides = array<i32>} : memref<1x6x128xf32, #tpu.memory_space<vmem>>, vector<1x6x128xf32>,
    return
  }
  func.func @transform_0(%arg0: i32, %arg1: i32) -> (i32, i32, i32) {
    %c0_i32 = arith.constant 0 : i32
    %c0_i32_0 = arith.constant 0 : i32
    return %arg0, %c0_i32, %arg1 : i32, i32, i32
  }
  func.func @transform_1(%arg0: i32, %arg1: i32) -> (i32, i32, i32) {
    %c1_i32 = arith.constant 1 : i32
    %0 = arith.addi %arg1, %c1_i32 : i32
    %c1_i32_0 = arith.constant 1 : i32
    %1 = arith.muli %0, %c1_i32_0 : i32
    %c0_i32 = arith.constant 0 : i32
    %c0_i32_1 = arith.constant 0 : i32
    return %arg0, %c0_i32, %1 : i32, i32, i32
  }
  func.func @transform_2(%arg0: i32, %arg1: i32) -> (i32, i32) {
    %c0_i32 = arith.constant 0 : i32
    %c0_i32_0 = arith.constant 0 : i32
    %c0_i32_1 = arith.constant 0 : i32
    return %c0_i32, %c0_i32_0 : i32, i32
  }
  func.func @transform_3(%arg0: i32, %arg1: i32) -> (i32, i32) {
    %c0_i32 = arith.constant 0 : i32
    %c0_i32_0 = arith.constant 0 : i32
    %c0_i32_1 = arith.constant 0 : i32
    return %c0_i32, %c0_i32_0 : i32, i32
  }
  func.func @transform_4(%arg0: i32, %arg1: i32) -> (i32, i32, i32) {
    %c0_i32 = arith.constant 0 : i32
    %c0_i32_0 = arith.constant 0 : i32
    return %arg0, %c0_i32, %arg1 : i32, i32, i32
  }
}

</mosaic_0001>

<llo_original>
// kernel: tpu_custom_call.1
$region0: #{tpu_custom_call.1}
  #allocation0 [shape = 'u32[]', space=smem, size = 0x4, offset = 0x4, fixed_abs, tag = 'smem constant byte address 0x4 - core index']
  #allocation1 [shape = 'u32[144,128]{1,0:T(1,128)}', space=vmem, size = 0x12000, scoped, tag = 'internal scratch']
  %s0 = inlined_call_operand.hbm [shape: f32[2,4,256], index: 0, kind: input, shape index: {}]
  %s1 = inlined_call_operand.hbm [shape: f32[2,4,256], index: 1, kind: input, shape index: {}]
  %s2 = inlined_call_operand.vmem [shape: f32[6,16], index: 2, kind: input, shape index: {}]
  %s3 = inlined_call_operand.vmem [shape: f32[6,1], index: 3, kind: input, shape index: {}]
  %s4 = inlined_call_operand.vmem [shape: f32[2,6,16], index: 4, kind: output, shape index: {}]
  %s5 = sld [smem:[#allocation0]]
  $region57: #{tpu_custom_call.1} parent=0
    _
  %s7 = ssub.s32 1, %s5
  %s8 = scalar_select 0, %s7, %s5
  $region1: #{tpu_custom_call.1} parent=0
    #allocation2 [shape = 'u8[4096]{0}', space=vmem, size = 0x1000, scoped, tag = 'input window, operand 0']
    #allocation3 [shape = 's32[2]{0}', space=sflag, size = 0x8, scoped, tag = 'scoped memory for tpu_custom_call.1']
    #allocation4 [shape = 'u8[4096]{0}', space=vmem, size = 0x1000, scoped, tag = 'input window, operand 1']
    #allocation5 [shape = 's32[2]{0}', space=sflag, size = 0x8, scoped, tag = 'scoped memory for tpu_custom_call.1']
    %9 = vsyncpa [#allocation3], 0
    %s10 = scalar_lea.sflag [#allocation3], 1
    %11 = vsyncpa %s10, 0
    %12 = vsyncpa [#allocation5], 0
    %s13 = scalar_lea.sflag [#allocation5], 1
    %14 = vsyncpa %s13, 0
    loop: start=0, step=1, limit=4
    $region2: #{tpu_custom_call.1} parent=1 // loop_pre_header
      _
    $region3: #{tpu_custom_call.1} parent=1 // loop_header
      %s16 = sphi 0, %s20
      %p17 = scmp.ge.s32.totalorder %s16, 4
      %s23 = sphi 0, %s35
      %s24 = sphi 0, %s31
      %s25 = sphi 0, %s23
      %s26 = sphi 0, %s24
      %s27 = sphi 0, %s25
      %s28 = sphi 0, %s26
      %s40 = sphi 0, %s42
      %s43 = sphi 0, %s40
      %s44 = sphi 0, %s43
      %s60 = sphi 0, %s44
      %s70 = sphi 0, %s72
      %s73 = sphi 0, %s70
      %s74 = sphi 0, %s73
      %s90 = sphi 0, %s74
      %s94 = sphi 0, %s94
      %s96 = sphi 0, %s94
      %s97 = sphi 0, %s96
      %s111 = sphi 0, %s97
      %s115 = sphi 0, %s115
      %s117 = sphi 0, %s115
      %s118 = sphi 0, %s117
      %s132 = sphi 0, %s118
      %s140 = sphi 0, %s142
      %s143 = sphi 0, %s140
      %s144 = sphi 0, %s143
      %s160 = sphi 0, %s144
    $region4: #{tpu_custom_call.1} parent=1 // loop_header_branch
      %19 = sbr.rel (%p17) target = $region8
    $region5: #{tpu_custom_call.1} parent=1 // loop_body
      %s21 = ssub.s32 %s16, 1
      %s22 = ssub.s32 %s16, 2
      %s29 = sadd.s32 1, %s24
      %p30 = scmp.ge.s32.totalorder %s29, 1
      %s31 = scalar_select %p30, 0, %s29
      %s32 = sadd.s32 1, %s23
      %s33 = scalar_select %p30, %s32, %s23
      %p34 = scmp.ge.s32.totalorder %s33, 2
      %s35 = scalar_select %p34, 0, %s33
      %s36 = ssub.s32 %s23, %s35
      %s37 = ssub.s32 %s24, %s31
      %s38 = sor.u32 %s36, %s37
      %p39 = scmp.eq.s32.totalorder %s38, 0
      %s41 = sadd.s32 %s40, 1
      %s42 = scalar_select %p39, %s40, %s41
      %p45 = pneg %p39
      %p46 = scmp.eq.s32.totalorder %s16, 1
      %p47 = por %p45, %p46
      %p48 = scmp.ne.s32.totalorder %s40, %s43
      %p49 = scmp.eq.s32.totalorder %s16, 0
      %p50 = por %p48, %p49
      %p51 = scmp.ne.s32.totalorder %s40, %s43
      %p52 = scmp.eq.s32.totalorder %s21, 1
      %p53 = por %p51, %p52
      %p54 = scmp.ne.s32.totalorder %s43, %s44
      %p55 = scmp.eq.s32.totalorder %s21, 0
      %p56 = por %p54, %p55
      %p57 = scmp.ne.s32.totalorder %s43, %s44
      %p58 = scmp.eq.s32.totalorder %s22, 1
      %p59 = por %p57, %p58
      %p61 = scmp.ne.s32.totalorder %s44, %s60
      %p62 = scmp.eq.s32.totalorder %s22, 0
      %p63 = por %p61, %p62
      %s64 = sadd.s32 %s24, 1
      %s65 = sadd.s32 %s31, 1
      %s66 = ssub.s32 %s23, %s35
      %s67 = ssub.s32 %s64, %s65
      %s68 = sor.u32 %s66, %s67
      %p69 = scmp.eq.s32.totalorder %s68, 0
      %s71 = sadd.s32 %s70, 1
      %s72 = scalar_select %p69, %s70, %s71
      %p75 = pneg %p69
      %p76 = scmp.eq.s32.totalorder %s16, 1
      %p77 = por %p75, %p76
      %p78 = scmp.ne.s32.totalorder %s70, %s73
      %p79 = scmp.eq.s32.totalorder %s16, 0
      %p80 = por %p78, %p79
      %p81 = scmp.ne.s32.totalorder %s70, %s73
      %p82 = scmp.eq.s32.totalorder %s21, 1
      %p83 = por %p81, %p82
      %p84 = scmp.ne.s32.totalorder %s73, %s74
      %p85 = scmp.eq.s32.totalorder %s21, 0
      %p86 = por %p84, %p85
      %p87 = scmp.ne.s32.totalorder %s73, %s74
      %p88 = scmp.eq.s32.totalorder %s22, 1
      %p89 = por %p87, %p88
      %p91 = scmp.ne.s32.totalorder %s74, %s90
      %p92 = scmp.eq.s32.totalorder %s22, 0
      %p93 = por %p91, %p92
      %s95 = sadd.s32 %s94, 1
      %p98 = scmp.eq.s32.totalorder %s16, 1
      %p99 = scmp.ne.s32.totalorder %s94, %s96
      %p100 = scmp.eq.s32.totalorder %s16, 0
      %p101 = por %p99, %p100
      %p102 = scmp.ne.s32.totalorder %s94, %s96
      %p103 = scmp.eq.s32.totalorder %s21, 1
      %p104 = por %p102, %p103
      %p105 = scmp.ne.s32.totalorder %s96, %s97
      %p106 = scmp.eq.s32.totalorder %s21, 0
      %p107 = por %p105, %p106
      %p108 = scmp.ne.s32.totalorder %s96, %s97
      %p109 = scmp.eq.s32.totalorder %s22, 1
      %p110 = por %p108, %p109
      %p112 = scmp.ne.s32.totalorder %s97, %s111
      %p113 = scmp.eq.s32.totalorder %s22, 0
      %p114 = por %p112, %p113
      %s116 = sadd.s32 %s115, 1
      %p119 = scmp.eq.s32.totalorder %s16, 1
      %p120 = scmp.ne.s32.totalorder %s115, %s117
      %p121 = scmp.eq.s32.totalorder %s16, 0
      %p122 = por %p120, %p121
      %p123 = scmp.ne.s32.totalorder %s115, %s117
      %p124 = scmp.eq.s32.totalorder %s21, 1
      %p125 = por %p123, %p124
      %p126 = scmp.ne.s32.totalorder %s117, %s118
      %p127 = scmp.eq.s32.totalorder %s21, 0
      %p128 = por %p126, %p127
      %p129 = scmp.ne.s32.totalorder %s117, %s118
      %p130 = scmp.eq.s32.totalorder %s22, 1
      %p131 = por %p129, %p130
      %p133 = scmp.ne.s32.totalorder %s118, %s132
      %p134 = scmp.eq.s32.totalorder %s22, 0
      %p135 = por %p133, %p134
      %s136 = ssub.s32 %s23, %s35
      %s137 = ssub.s32 %s24, %s31
      %s138 = sor.u32 %s136, %s137
      %p139 = scmp.eq.s32.totalorder %s138, 0
      %s141 = sadd.s32 %s140, 1
      %s142 = scalar_select %p139, %s140, %s141
      %p145 = pneg %p139
      %p146 = scmp.eq.s32.totalorder %s16, 1
      %p147 = por %p145, %p146
      %p148 = scmp.ne.s32.totalorder %s140, %s143
      %p149 = scmp.eq.s32.totalorder %s16, 0
      %p150 = por %p148, %p149
      %p151 = scmp.ne.s32.totalorder %s140, %s143
      %p152 = scmp.eq.s32.totalorder %s21, 1
      %p153 = por %p151, %p152
      %p154 = scmp.ne.s32.totalorder %s143, %s144
      %p155 = scmp.eq.s32.totalorder %s21, 0
      %p156 = por %p154, %p155
      %p157 = scmp.ne.s32.totalorder %s143, %s144
      %p158 = scmp.eq.s32.totalorder %s22, 1
      %p159 = por %p157, %p158
      %p161 = scmp.ne.s32.totalorder %s144, %s160
      %p162 = scmp.eq.s32.totalorder %s22, 0
      %p163 = por %p161, %p162
      %p164 = scmp.le.s32.totalorder 1, %s16
      %p165 = scmp.lt.s32.totalorder %s16, 3
      %p166 = pnand %p164, %p165
      %p167 = pneg %p166
      // Predicated region
      $region9: #{tpu_custom_call.1} parent=5 // pred_check
        _
      $region10: #{tpu_custom_call.1} parent=5 // pred_check_branch
        %169 = sbr.rel (%p166) target = $region12
      $region11: #{tpu_custom_call.1} parent=5 // pred_region
        %s170 = ssub.s32 %s16, 1
        // Predicated region
        $region13: #{tpu_custom_call.1} parent=11 // pred_check
          %p171 = pneg %p107
        $region14: #{tpu_custom_call.1} parent=11 // pred_check_branch
          %173 = sbr.rel (%p171) target = $region16
        $region15: #{tpu_custom_call.1} parent=11 // pred_region
          _
        $region16: #{tpu_custom_call.1} parent=11 // pred_fallthru
          _
        // Predicated region
        $region17: #{tpu_custom_call.1} parent=11 // pred_check
          %p174 = pneg %p128
        $region18: #{tpu_custom_call.1} parent=11 // pred_check_branch
          %176 = sbr.rel (%p174) target = $region20
        $region19: #{tpu_custom_call.1} parent=11 // pred_region
          _
        $region20: #{tpu_custom_call.1} parent=11 // pred_fallthru
          _
      $region12: #{tpu_custom_call.1} parent=5 // pred_fallthru
        _
      %p177 = scmp.lt.s32.totalorder %s16, 2
      // Predicated region
      $region21: #{tpu_custom_call.1} parent=5 // pred_check
        %p178 = pneg %p177
      $region22: #{tpu_custom_call.1} parent=5 // pred_check_branch
        %180 = sbr.rel (%p178) target = $region24
      $region23: #{tpu_custom_call.1} parent=5 // pred_region
        // Predicated region
        $region25: #{tpu_custom_call.1} parent=23 // pred_check
          %p181 = pneg %p50
        $region26: #{tpu_custom_call.1} parent=23 // pred_check_branch
          %183 = sbr.rel (%p181) target = $region28
        $region27: #{tpu_custom_call.1} parent=23 // pred_region
          %s184 = sand.u32 %s40, 1
          %s185 = scalar_lea.sflag [#allocation3], %s184
          %s186 = sand.u32 %s40, 1
          %s187 = smul.addr %s186, 4
          %s188 = scalar_lea.vmem [#allocation2], %s187
          %s190 = ssub.s32 64, 64
          %191 = vsyncadd %s185, %s190
          %s192 = smul.addr %s23, 2
          %s193 = sadd.s32 %s24, %s192
          %s194 = smul.addr %s193, 64
          %s195 = scalar_lea.hbm %s0, %s194
          %s197 = sshll.u32 %s188, 4
          %s198 = int_to_ptr.vmem [resolvable:$true] %s197
          %200 = dma.hbm_to_vmem [thread:$0]  %s195, 64, %s198, %s185
        $region28: #{tpu_custom_call.1} parent=23 // pred_fallthru
          _
        // Predicated region
        $region29: #{tpu_custom_call.1} parent=23 // pred_check
          %p201 = pneg %p80
        $region30: #{tpu_custom_call.1} parent=23 // pred_check_branch
          %203 = sbr.rel (%p201) target = $region32
        $region31: #{tpu_custom_call.1} parent=23 // pred_region
          %s204 = sand.u32 %s70, 1
          %s205 = scalar_lea.sflag [#allocation5], %s204
          %s206 = sand.u32 %s70, 1
          %s207 = smul.addr %s206, 4
          %s208 = scalar_lea.vmem [#allocation4], %s207
          %s209 = sadd.s32 %s24, 1
          %s211 = ssub.s32 64, 64
          %212 = vsyncadd %s205, %s211
          %s213 = smul.addr %s23, 2
          %s214 = sadd.s32 %s209, %s213
          %s215 = smul.addr %s214, 64
          %s216 = scalar_lea.hbm %s1, %s215
          %s218 = sshll.u32 %s208, 4
          %s219 = int_to_ptr.vmem [resolvable:$true] %s218
          %221 = dma.hbm_to_vmem [thread:$0]  %s216, 64, %s219, %s205
        $region32: #{tpu_custom_call.1} parent=23 // pred_fallthru
          _
      $region24: #{tpu_custom_call.1} parent=5 // pred_fallthru
        _
      %p222 = scmp.le.s32.totalorder 1, %s16
      %p223 = scmp.lt.s32.totalorder %s16, 3
      %p224 = pnand %p222, %p223
      %p225 = pneg %p224
      // Predicated region
      $region33: #{tpu_custom_call.1} parent=5 // pred_check
        _
      $region34: #{tpu_custom_call.1} parent=5 // pred_check_branch
        %227 = sbr.rel (%p224) target = $region36
      $region35: #{tpu_custom_call.1} parent=5 // pred_region
        %s228 = ssub.s32 %s16, 1
        %s229 = sand.u32 %s43, 1
        %s230 = scalar_lea.sflag [#allocation3], %s229
        %s231 = sand.u32 %s43, 1
        %s232 = smul.addr %s231, 4
        %s233 = scalar_lea.vmem [#allocation2], %s232
        // Predicated region
        $region37: #{tpu_custom_call.1} parent=35 // pred_check
          %p234 = pneg %p56
        $region38: #{tpu_custom_call.1} parent=35 // pred_check_branch
          %236 = sbr.rel (%p234) target = $region40
        $region39: #{tpu_custom_call.1} parent=35 // pred_region
          %237 = dma.done %s230, 64
        $region40: #{tpu_custom_call.1} parent=35 // pred_fallthru
          _
        %s238 = sand.u32 %s73, 1
        %s239 = scalar_lea.sflag [#allocation5], %s238
        %s240 = sand.u32 %s73, 1
        %s241 = smul.addr %s240, 4
        %s242 = scalar_lea.vmem [#allocation4], %s241
        // Predicated region
        $region41: #{tpu_custom_call.1} parent=35 // pred_check
          %p243 = pneg %p86
        $region42: #{tpu_custom_call.1} parent=35 // pred_check_branch
          %245 = sbr.rel (%p243) target = $region44
        $region43: #{tpu_custom_call.1} parent=35 // pred_region
          %246 = dma.done %s239, 64
        $region44: #{tpu_custom_call.1} parent=35 // pred_fallthru
          _
        %s247 = sand.u32 %s43, 1
        %s248 = scalar_lea.sflag [#allocation3], %s247
        %s249 = sand.u32 %s43, 1
        %s250 = smul.addr %s249, 4
        %s251 = scalar_lea.vmem [#allocation2], %s250
        %p252 = pneg %p56
        %p253 = pneg %p53
        %s254 = sand.u32 %s73, 1
        %s255 = scalar_lea.sflag [#allocation5], %s254
        %s256 = sand.u32 %s73, 1
        %s257 = smul.addr %s256, 4
        %s258 = scalar_lea.vmem [#allocation4], %s257
        %p259 = pneg %p86
        %p260 = pneg %p83
        %p261 = pneg %p107
        %p262 = pneg %p104
        %p263 = pneg %p128
        %p264 = pneg %p125
        %p265 = pneg %p156
        %p266 = pneg %p153
        %p267 = scmp.lt.s32.totalorder %s25, 1
        %s268 = scalar_select %p267, %s25, 1
        %p269 = scmp.lt.s32.totalorder %s26, 0
        %s270 = scalar_select %p269, %s26, 0
        %s271 = sadd.s32 %s270, %s268
        %s272 = smul.addr %s271, 8
        %s273 = scalar_lea.vmem %s4, %s272
        %s274 = sadd.s32 %s26, 1
        %p275 = scmp.lt.s32.totalorder %s25, 1
        %s276 = scalar_select %p275, %s25, 1
        %p277 = scmp.lt.s32.totalorder %s26, 0
        %s278 = scalar_select %p277, %s26, 0
        %s279 = sadd.s32 %s278, %s276
        %s280 = smul.addr %s279, 8
        %s281 = scalar_lea.vmem %s4, %s280
        %v282 = vld [vmem:[%s233] sm:$0xf]
        %v283 = vld [vmem:[%s242] sm:$0xf]
        %v284 = vld [vmem:[%s2] sm:$0x3f]
        %286 = vrot.lane.b32.xlu0 %v284, 124
        %v287 = vpop.permute.xlu0 %286
        %290 = vrot.lane.b32.xlu0 %v282, 127
        %v291 = vpop.permute.xlu0 %290
        %292 = vrot.lane.b32.xlu0 %v283, 127
        %v293 = vpop.permute.xlu0 %292
        %vm294 = vcmask 1039360
        %v295 = vsel %vm294, %v291, %v293
        %vm296 = vcmask 31744
        %v297 = vsel %vm296, %v287, 0
        %vm299 = vcmask 1043456
        %v300 = vsel %vm299, %v295, 0
        %302 = vmatprep.subr.mxu0 0.0
        %303 = vmatpush1.msra.mxu0 0.0
        %304 = vmatprep.subr.mxu0 0.0
        %305 = vmatpush1.msra.mxu0 0.0
        %306 = vmatprep.subr.mxu0 0.0
        %307 = vmatpush1.msra.mxu0 0.0
        %308 = vmatprep.subr.mxu0 0.0
        %309 = vmatpush1.msra.mxu0 0.0
        %310 = vmatprep.subr.mxu0 0.0
        %311 = vmatpush1.msra.mxu0 0.0
        %312 = vmatprep.subr.mxu0 0.0
        %313 = vmatpush1.msra.mxu0 0.0
        %314 = vmatprep.subr.mxu0 0.0
        %315 = vmatpush1.msra.mxu0 0.0
        %316 = vmatprep.subr.mxu0 0.0
        %317 = vmatpush1.msra.mxu0 0.0
        %318 = vmatprep.subr.mxu0 0.0
        %319 = vmatpush1.msra.mxu0 0.0
        %320 = vmatprep.subr.mxu0 0.0
        %321 = vmatpush1.msra.mxu0 0.0
        %322 = vmatprep.subr.mxu0 0.0
        %323 = vmatpush1.msra.mxu0 0.0
        %324 = vmatprep.subr.mxu0 0.0
        %325 = vmatpush1.msra.mxu0 0.0
        %326 = vmatprep.subr.mxu0 0.0
        %327 = vmatpush1.msra.mxu0 0.0
        %328 = vmatprep.subr.mxu0 0.0
        %329 = vmatpush1.msra.mxu0 0.0
        %330 = vmatprep.subr.mxu0 0.0
        %331 = vmatpush1.msra.mxu0 0.0
        %332 = vmatprep.subr.mxu0 0.0
        %333 = vmatpush1.msra.mxu0 %v300
        %334 = vmatprep.subr.mxu0 0.0
        %335 = vmatpush2.msra.mxu0 0.0
        %336 = vmatprep.subr.mxu0 0.0
        %337 = vmatpush2.msra.mxu0 0.0
        %338 = vmatprep.subr.mxu0 0.0
        %339 = vmatpush2.msra.mxu0 0.0
        %340 = vmatprep.subr.mxu0 0.0
        %341 = vmatpush2.msra.mxu0 0.0
        %342 = vmatprep.subr.mxu0 0.0
        %343 = vmatpush2.msra.mxu0 0.0
        %344 = vmatprep.subr.mxu0 0.0
        %345 = vmatpush2.msra.mxu0 0.0
        %346 = vmatprep.subr.mxu0 0.0
        %347 = vmatpush2.msra.mxu0 0.0
        %348 = vmatprep.subr.mxu0 0.0
        %349 = vmatpush2.msra.mxu0 0.0
        %350 = vmatprep.subr.mxu0 0.0
        %351 = vmatpush2.msra.mxu0 0.0
        %352 = vmatprep.subr.mxu0 0.0
        %353 = vmatpush2.msra.mxu0 0.0
        %354 = vmatprep.subr.mxu0 0.0
        %355 = vmatpush2.msra.mxu0 0.0
        %356 = vmatprep.subr.mxu0 0.0
        %357 = vmatpush2.msra.mxu0 0.0
        %358 = vmatprep.subr.mxu0 0.0
        %359 = vmatpush2.msra.mxu0 0.0
        %360 = vmatprep.subr.mxu0 0.0
        %361 = vmatpush2.msra.mxu0 0.0
        %362 = vmatprep.subr.mxu0 0.0
        %363 = vmatpush2.msra.mxu0 0.0
        %364 = vmatprep.subr.mxu0 0.0
        %365 = vmatpush2.msra.mxu0 0.0
        %366 = vmatprep.mubr.f32.mxu0 0.0
        %367 = vmatmul.mubr.f32.gmra.mxu0 %v297
        %v368 = vpop.f32.mrf.mxu0
        %v369 = vadd.f32 0.0, %v368
        %v370 = vpop.f32.mrf.mxu0
        %371 = vdwg.mxu0
        %v372 = vsel %vm296, %v284, 0
        %v374 = vsel %vm299, %v282, 0
        %376 = vmatprep.subr.mxu0 0.0
        %377 = vmatpush1.msra.mxu0 0.0
        %378 = vmatprep.subr.mxu0 0.0
        %379 = vmatpush1.msra.mxu0 0.0
        %380 = vmatprep.subr.mxu0 0.0
        %381 = vmatpush1.msra.mxu0 0.0
        %382 = vmatprep.subr.mxu0 0.0
        %383 = vmatpush1.msra.mxu0 0.0
        %384 = vmatprep.subr.mxu0 0.0
        %385 = vmatpush1.msra.mxu0 0.0
        %386 = vmatprep.subr.mxu0 0.0
        %387 = vmatpush1.msra.mxu0 0.0
        %388 = vmatprep.subr.mxu0 0.0
        %389 = vmatpush1.msra.mxu0 0.0
        %390 = vmatprep.subr.mxu0 0.0
        %391 = vmatpush1.msra.mxu0 0.0
        %392 = vmatprep.subr.mxu0 0.0
        %393 = vmatpush1.msra.mxu0 0.0
        %394 = vmatprep.subr.mxu0 0.0
        %395 = vmatpush1.msra.mxu0 0.0
        %396 = vmatprep.subr.mxu0 0.0
        %397 = vmatpush1.msra.mxu0 0.0
        %398 = vmatprep.subr.mxu0 0.0
        %399 = vmatpush1.msra.mxu0 0.0
        %400 = vmatprep.subr.mxu0 0.0
        %401 = vmatpush1.msra.mxu0 0.0
        %402 = vmatprep.subr.mxu0 0.0
        %403 = vmatpush1.msra.mxu0 0.0
        %404 = vmatprep.subr.mxu0 0.0
        %405 = vmatpush1.msra.mxu0 0.0
        %406 = vmatprep.subr.mxu0 0.0
        %407 = vmatpush1.msra.mxu0 %v374
        %408 = vmatprep.subr.mxu0 0.0
        %409 = vmatpush2.msra.mxu0 0.0
        %410 = vmatprep.subr.mxu0 0.0
        %411 = vmatpush2.msra.mxu0 0.0
        %412 = vmatprep.subr.mxu0 0.0
        %413 = vmatpush2.msra.mxu0 0.0
        %414 = vmatprep.subr.mxu0 0.0
        %415 = vmatpush2.msra.mxu0 0.0
        %416 = vmatprep.subr.mxu0 0.0
        %417 = vmatpush2.msra.mxu0 0.0
        %418 = vmatprep.subr.mxu0 0.0
        %419 = vmatpush2.msra.mxu0 0.0
        %420 = vmatprep.subr.mxu0 0.0
        %421 = vmatpush2.msra.mxu0 0.0
        %422 = vmatprep.subr.mxu0 0.0
        %423 = vmatpush2.msra.mxu0 0.0
        %424 = vmatprep.subr.mxu0 0.0
        %425 = vmatpush2.msra.mxu0 0.0
        %426 = vmatprep.subr.mxu0 0.0
        %427 = vmatpush2.msra.mxu0 0.0
        %428 = vmatprep.subr.mxu0 0.0
        %429 = vmatpush2.msra.mxu0 0.0
        %430 = vmatprep.subr.mxu0 0.0
        %431 = vmatpush2.msra.mxu0 0.0
        %432 = vmatprep.subr.mxu0 0.0
        %433 = vmatpush2.msra.mxu0 0.0
        %434 = vmatprep.subr.mxu0 0.0
        %435 = vmatpush2.msra.mxu0 0.0
        %436 = vmatprep.subr.mxu0 0.0
        %437 = vmatpush2.msra.mxu0 0.0
        %438 = vmatprep.subr.mxu0 0.0
        %439 = vmatpush2.msra.mxu0 0.0
        %440 = vmatprep.mubr.f32.mxu0 0.0
        %441 = vmatmul.mubr.f32.gmra.mxu0 %v372
        %v442 = vpop.f32.mrf.mxu0
        %v443 = vadd.f32 %v369, %v442
        %v444 = vpop.f32.mrf.mxu0
        %445 = vdwg.mxu0
        %446 = vrot.lane.b32.xlu0 %v284, 120
        %v447 = vpop.permute.xlu0 %446
        %448 = vrot.lane.b32.xlu0 %v282, 126
        %v449 = vpop.permute.xlu0 %448
        %450 = vrot.lane.b32.xlu0 %v283, 126
        %v451 = vpop.permute.xlu0 %450
        %vm452 = vcmask 1031168
        %v453 = vsel %vm452, %v449, %v451
        %v454 = vsel %vm296, %v447, 0
        %v456 = vsel %vm299, %v453, 0
        %458 = vmatprep.subr.mxu0 0.0
        %459 = vmatpush1.msra.mxu0 0.0
        %460 = vmatprep.subr.mxu0 0.0
        %461 = vmatpush1.msra.mxu0 0.0
        %462 = vmatprep.subr.mxu0 0.0
        %463 = vmatpush1.msra.mxu0 0.0
        %464 = vmatprep.subr.mxu0 0.0
        %465 = vmatpush1.msra.mxu0 0.0
        %466 = vmatprep.subr.mxu0 0.0
        %467 = vmatpush1.msra.mxu0 0.0
        %468 = vmatprep.subr.mxu0 0.0
        %469 = vmatpush1.msra.mxu0 0.0
        %470 = vmatprep.subr.mxu0 0.0
        %471 = vmatpush1.msra.mxu0 0.0
        %472 = vmatprep.subr.mxu0 0.0
        %473 = vmatpush1.msra.mxu0 0.0
        %474 = vmatprep.subr.mxu0 0.0
        %475 = vmatpush1.msra.mxu0 0.0
        %476 = vmatprep.subr.mxu0 0.0
        %477 = vmatpush1.msra.mxu0 0.0
        %478 = vmatprep.subr.mxu0 0.0
        %479 = vmatpush1.msra.mxu0 0.0
        %480 = vmatprep.subr.mxu0 0.0
        %481 = vmatpush1.msra.mxu0 0.0
        %482 = vmatprep.subr.mxu0 0.0
        %483 = vmatpush1.msra.mxu0 0.0
        %484 = vmatprep.subr.mxu0 0.0
        %485 = vmatpush1.msra.mxu0 0.0
        %486 = vmatprep.subr.mxu0 0.0
        %487 = vmatpush1.msra.mxu0 0.0
        %488 = vmatprep.subr.mxu0 0.0
        %489 = vmatpush1.msra.mxu0 %v456
        %490 = vmatprep.subr.mxu0 0.0
        %491 = vmatpush2.msra.mxu0 0.0
        %492 = vmatprep.subr.mxu0 0.0
        %493 = vmatpush2.msra.mxu0 0.0
        %494 = vmatprep.subr.mxu0 0.0
        %495 = vmatpush2.msra.mxu0 0.0
        %496 = vmatprep.subr.mxu0 0.0
        %497 = vmatpush2.msra.mxu0 0.0
        %498 = vmatprep.subr.mxu0 0.0
        %499 = vmatpush2.msra.mxu0 0.0
        %500 = vmatprep.subr.mxu0 0.0
        %501 = vmatpush2.msra.mxu0 0.0
        %502 = vmatprep.subr.mxu0 0.0
        %503 = vmatpush2.msra.mxu0 0.0
        %504 = vmatprep.subr.mxu0 0.0
        %505 = vmatpush2.msra.mxu0 0.0
        %506 = vmatprep.subr.mxu0 0.0
        %507 = vmatpush2.msra.mxu0 0.0
        %508 = vmatprep.subr.mxu0 0.0
        %509 = vmatpush2.msra.mxu0 0.0
        %510 = vmatprep.subr.mxu0 0.0
        %511 = vmatpush2.msra.mxu0 0.0
        %512 = vmatprep.subr.mxu0 0.0
        %513 = vmatpush2.msra.mxu0 0.0
        %514 = vmatprep.subr.mxu0 0.0
        %515 = vmatpush2.msra.mxu0 0.0
        %516 = vmatprep.subr.mxu0 0.0
        %517 = vmatpush2.msra.mxu0 0.0
        %518 = vmatprep.subr.mxu0 0.0
        %519 = vmatpush2.msra.mxu0 0.0
        %520 = vmatprep.subr.mxu0 0.0
        %521 = vmatpush2.msra.mxu0 0.0
        %522 = vmatprep.mubr.f32.mxu0 0.0
        %523 = vmatmul.mubr.f32.gmra.mxu0 %v454
        %v524 = vpop.f32.mrf.mxu0
        %v525 = vadd.f32 0.0, %v524
        %v526 = vpop.f32.mrf.mxu0
        %527 = vdwg.mxu0
        %v528 = vadd.f32 %v443, %v525
        %529 = vrot.lane.b32.xlu0 %v284, 116
        %v530 = vpop.permute.xlu0 %529
        %531 = vrot.lane.b32.xlu0 %v282, 125
        %v532 = vpop.permute.xlu0 %531
        %533 = vrot.lane.b32.xlu0 %v283, 125
        %v534 = vpop.permute.xlu0 %533
        %vm535 = vcmask 1022976
        %v536 = vsel %vm535, %v532, %v534
        %v537 = vsel %vm296, %v530, 0
        %v539 = vsel %vm299, %v536, 0
        %541 = vmatprep.subr.mxu0 0.0
        %542 = vmatpush1.msra.mxu0 0.0
        %543 = vmatprep.subr.mxu0 0.0
        %544 = vmatpush1.msra.mxu0 0.0
        %545 = vmatprep.subr.mxu0 0.0
        %546 = vmatpush1.msra.mxu0 0.0
        %547 = vmatprep.subr.mxu0 0.0
        %548 = vmatpush1.msra.mxu0 0.0
        %549 = vmatprep.subr.mxu0 0.0
        %550 = vmatpush1.msra.mxu0 0.0
        %551 = vmatprep.subr.mxu0 0.0
        %552 = vmatpush1.msra.mxu0 0.0
        %553 = vmatprep.subr.mxu0 0.0
        %554 = vmatpush1.msra.mxu0 0.0
        %555 = vmatprep.subr.mxu0 0.0
        %556 = vmatpush1.msra.mxu0 0.0
        %557 = vmatprep.subr.mxu0 0.0
        %558 = vmatpush1.msra.mxu0 0.0
        %559 = vmatprep.subr.mxu0 0.0
        %560 = vmatpush1.msra.mxu0 0.0
        %561 = vmatprep.subr.mxu0 0.0
        %562 = vmatpush1.msra.mxu0 0.0
        %563 = vmatprep.subr.mxu0 0.0
        %564 = vmatpush1.msra.mxu0 0.0
        %565 = vmatprep.subr.mxu0 0.0
        %566 = vmatpush1.msra.mxu0 0.0
        %567 = vmatprep.subr.mxu0 0.0
        %568 = vmatpush1.msra.mxu0 0.0
        %569 = vmatprep.subr.mxu0 0.0
        %570 = vmatpush1.msra.mxu0 0.0
        %571 = vmatprep.subr.mxu0 0.0
        %572 = vmatpush1.msra.mxu0 %v539
        %573 = vmatprep.subr.mxu0 0.0
        %574 = vmatpush2.msra.mxu0 0.0
        %575 = vmatprep.subr.mxu0 0.0
        %576 = vmatpush2.msra.mxu0 0.0
        %577 = vmatprep.subr.mxu0 0.0
        %578 = vmatpush2.msra.mxu0 0.0
        %579 = vmatprep.subr.mxu0 0.0
        %580 = vmatpush2.msra.mxu0 0.0
        %581 = vmatprep.subr.mxu0 0.0
        %582 = vmatpush2.msra.mxu0 0.0
        %583 = vmatprep.subr.mxu0 0.0
        %584 = vmatpush2.msra.mxu0 0.0
        %585 = vmatprep.subr.mxu0 0.0
        %586 = vmatpush2.msra.mxu0 0.0
        %587 = vmatprep.subr.mxu0 0.0
        %588 = vmatpush2.msra.mxu0 0.0
        %589 = vmatprep.subr.mxu0 0.0
        %590 = vmatpush2.msra.mxu0 0.0
        %591 = vmatprep.subr.mxu0 0.0
        %592 = vmatpush2.msra.mxu0 0.0
        %593 = vmatprep.subr.mxu0 0.0
        %594 = vmatpush2.msra.mxu0 0.0
        %595 = vmatprep.subr.mxu0 0.0
        %596 = vmatpush2.msra.mxu0 0.0
        %597 = vmatprep.subr.mxu0 0.0
        %598 = vmatpush2.msra.mxu0 0.0
        %599 = vmatprep.subr.mxu0 0.0
        %600 = vmatpush2.msra.mxu0 0.0
        %601 = vmatprep.subr.mxu0 0.0
        %602 = vmatpush2.msra.mxu0 0.0
        %603 = vmatprep.subr.mxu0 0.0
        %604 = vmatpush2.msra.mxu0 0.0
        %605 = vmatprep.mubr.f32.mxu0 0.0
        %606 = vmatmul.mubr.f32.gmra.mxu0 %v537
        %v607 = vpop.f32.mrf.mxu0
        %v608 = vadd.f32 0.0, %v607
        %v609 = vpop.f32.mrf.mxu0
        %610 = vdwg.mxu0
        %v611 = vadd.f32 %v528, %v608
        %v612 = vld [vmem:[%s3] sm:$0x3f]
        %614 = vset.pattern.permute.xlu0 0
        %615 = vperm.xlu0 %614, %v612
        %v616 = vpop.permute.xlu0 %615
        %v618 = vadd.f32 %v611, %v616
        %v619 = vmax.f32 %v618, 0.0
        %620 = vst [vmem:[%s281] sm:$0x3f] %v619
        %p621 = scmp.lt.s32.totalorder %s25, 1
        %s622 = scalar_select %p621, %s25, 1
        %p623 = scmp.lt.s32.totalorder %s26, 0
        %s624 = scalar_select %p623, %s26, 0
        %s625 = sadd.s32 %s624, %s622
        %s626 = smul.addr %s625, 8
        %s627 = scalar_lea.vmem %s4, %s626
        // Predicated region
        $region45: #{tpu_custom_call.1} parent=35 // pred_check
          %p628 = pneg %p153
        $region46: #{tpu_custom_call.1} parent=35 // pred_check_branch
          %630 = sbr.rel (%p628) target = $region48
        $region47: #{tpu_custom_call.1} parent=35 // pred_region
          _
        $region48: #{tpu_custom_call.1} parent=35 // pred_fallthru
          _
      $region36: #{tpu_custom_call.1} parent=5 // pred_fallthru
        _
      %p631 = scmp.le.s32.totalorder 2, %s16
      // Predicated region
      $region49: #{tpu_custom_call.1} parent=5 // pred_check
        %p632 = pneg %p631
      $region50: #{tpu_custom_call.1} parent=5 // pred_check_branch
        %634 = sbr.rel (%p632) target = $region52
      $region51: #{tpu_custom_call.1} parent=5 // pred_region
        %s635 = ssub.s32 %s16, 2
        // Predicated region
        $region53: #{tpu_custom_call.1} parent=51 // pred_check
          %p636 = pneg %p159
        $region54: #{tpu_custom_call.1} parent=51 // pred_check_branch
          %638 = sbr.rel (%p636) target = $region56
        $region55: #{tpu_custom_call.1} parent=51 // pred_region
          %p639 = scmp.lt.s32.totalorder %s27, 1
          %s640 = scalar_select %p639, %s27, 1
          %p641 = scmp.lt.s32.totalorder %s28, 0
          %s642 = scalar_select %p641, %s28, 0
          %s643 = sadd.s32 %s642, %s640
          %s644 = smul.addr %s643, 8
          %s645 = scalar_lea.vmem %s4, %s644
        $region56: #{tpu_custom_call.1} parent=51 // pred_fallthru
          _
      $region52: #{tpu_custom_call.1} parent=5 // pred_fallthru
        _
    $region6: #{tpu_custom_call.1} parent=1 // loop_footer
      %s20 = sadd.s32 1, %s16
    $region7: #{tpu_custom_call.1} parent=1 // loop_footer_branch
      %15 = sbr.rel target = $region3
    $region8: #{tpu_custom_call.1} parent=1 // loop_exit
      _
    %646 = vsyncpa [#allocation3], 1
    %s647 = scalar_lea.sflag [#allocation3], 1
    %648 = vsyncpa %s647, 1
    %649 = vsyncpa [#allocation5], 1
    %s650 = scalar_lea.sflag [#allocation5], 1
    %651 = vsyncpa %s650, 1

</llo_original>
